<compile_context>
chip_gen: v7x
topology: tpu7x:2x2x1
jax: 0.10.0
libtpu: 0.0.40
codegen_flags: <defaults>
</compile_context>

<pallas_src>
import functools

import jax
import jax.numpy as jnp
from jax import lax
from jax.experimental import pallas as pl
from jax.experimental.pallas import tpu as pltpu


def _row_softmax(x):
    m = jnp.max(x, axis=-1, keepdims=True)
    e = jnp.exp(x - m)
    # Exact divide: the prologue runs once, approx reciprocal bought nothing and
    # its error was amplified through the Chebyshev recurrence.
    return e / jnp.sum(e, axis=-1, keepdims=True)


# ---------------------------------------------------------------------------
# Prologue kernel (no grid, runs once): batch-invariant adjacency, Chebyshev
# supports T_1..T_{K-1} (T_0 = I handled implicitly) and node bias E @ bias_pool.
# ---------------------------------------------------------------------------
def _supports_bias_kernel(e_ref, mask_ref, bpool_ref, s_ref, bias_ref,
                          *, cheb_k, normalize):
    E = e_ref[...]                                                   # (N, D) f32
    raw = lax.dot_general(E, E, (((1,), (1,)), ((), ())),
                          preferred_element_type=jnp.float32)        # E @ E^T
    A = _row_softmax(jnp.maximum(raw, 0.0))
    A = A * mask_ref[...]                                            # 1 keep, 0 mask
    if normalize:
        A = _row_softmax(A)

    s_ref[0] = A                                                     # T_1
    if cheb_k > 2:
        n = A.shape[0]
        rows = lax.broadcasted_iota(jnp.int32, (n, n), 0)
        cols = lax.broadcasted_iota(jnp.int32, (n, n), 1)
        t_km2 = (rows == cols).astype(jnp.float32)                   # T_0 = I
        t_km1 = A
        for k in range(2, cheb_k):
            t_k = (2.0 * jnp.dot(A, t_km1, preferred_element_type=jnp.float32)
                   - t_km2)
            s_ref[k - 1] = t_k
            t_km2, t_km1 = t_km1, t_k

    bias_ref[...] = jnp.dot(E, bpool_ref[...],
                            preferred_element_type=jnp.float32)      # (N, Co)


# ---------------------------------------------------------------------------
# Main kernel: one grid step == Bt batch elements folded into R = Bt*Np rows.
#   x_ref : (R, Ci)        bf16  batch-folded input rows (b-major, n-minor)
#   s_ref : (K-1, Np, Np)  bf16  Chebyshev supports (batch-invariant resident)
#   w_ref : (K*D*Ci, Co)   bf16  weight pool, rows ordered (k, d, i)
#   e_ref : (R, D*Ci)      f32   E replicated: column d*Ci+i holds E[n, d]
#   b_ref : (R, Co)        f32   E @ bias_pool tiled over the folded rows
# ---------------------------------------------------------------------------
def _avwgcn_kernel(x_ref, s_ref, w_ref, e_ref, b_ref, out_ref,
                   *, cheb_k, embed_dim, bt, n_pad):
    f32 = jnp.float32
    # Lane-tile x by the embedding dim: (R, Ci) -> (R, D*Ci).  D*Ci stays well
    # under 128 lanes, so the graph-conv matmuls below take the same MXU time
    # as the un-tiled RHS, and the embedding fold becomes a plain elementwise
    # multiply against the precomputed e_ref (no per-d slices / broadcasts).
    x_w = jnp.tile(x_ref[...], (1, embed_dim))                       # (R, D*Ci) bf16
    e_rep = e_ref[...]                                               # (R, D*Ci) f32

    # Pieces of the fused LHS  H[(b,n), (k,d,i)] = E[n,d] * G_k[b,n,i].
    h_parts = [e_rep * x_w.astype(f32)]                              # k = 0: T_0 = I
    for k in range(1, cheb_k):
        t_k = s_ref[k - 1]                                           # (Np, Np) bf16
        if bt == 1:
            g_k = jnp.dot(t_k, x_w, preferred_element_type=f32)
        else:
            # Per-batch sub-block graph conv: no kron(I_Bt, T_k) redundancy.
            g_k = jnp.concatenate(
                [jnp.dot(t_k, x_w[b * n_pad:(b + 1) * n_pad, :],
                         preferred_element_type=f32) for b in range(bt)],
                axis=0)                                              # (R, D*Ci) f32
        h_parts.append(e_rep * g_k)

    h = jnp.concatenate(h_parts, axis=-1)                            # (R, K*D*Ci)
    # Single wide (k,d,i) contraction on the MXU (bf16 operands, f32 acc).
    out_ref[...] = (jnp.dot(h.astype(jnp.bfloat16), w_ref[...],
                            preferred_element_type=f32) + b_ref[...])


def _step_vmem_bytes(bt, n_pad, *, k, d, ci, co):
    """Rough per-step VMEM footprint: bf16 residents + double-buffered x/out
    stream blocks + single-buffered f32 constants + in-kernel temporaries."""
    r = bt * n_pad
    const_b = (k - 1) * n_pad * n_pad * 2 + k * d * ci * co * 2      # supports + weights
    const_b += r * d * ci * 4 + r * co * 4                           # E_rep + bias
    stream_b = 2 * (r * ci * 2 + r * co * 4)                         # x / out (dbl-buf)
    temps_b = r * k * d * ci * 4 + 2 * r * d * ci * 4                # h, g_k / x_w
    return const_b + stream_b + temps_b


def _pick_batch_tile(batch, n_pad, *, k, d, ci, co,
                     target_rows=512, vmem_budget=12 * 2 ** 20):
    """Largest divisor Bt of `batch` whose per-step working set fits a
    conservative (v5e-safe) VMEM budget and whose row block stays near the
    measured sweet spot; keeps >=2 grid steps when possible so v7x can shard
    the batch axis across its two TensorCores."""
    best = 1
    for bt in range(1, batch + 1):
        if batch % bt:
            continue
        rows = bt * n_pad
        if rows <= max(target_rows, n_pad) and \
                _step_vmem_bytes(bt, n_pad, k=k, d=d, ci=ci, co=co) <= vmem_budget:
            best = bt
    if best == batch and batch > 1:
        best = max(t for t in range(1, batch) if batch % t == 0)
    return best


def avwgcn_pallas(x, node_embeddings, s_mask, weights_pool, bias_pool,
                  *, normalize=False):
    B, N, Ci = x.shape
    D, K, Ci_w, Co = weights_pool.shape
    assert Ci_w == Ci and node_embeddings.shape == (N, D)
    assert s_mask.shape == (N, N) and bias_pool.shape == (D, Co)
    assert K >= 2, "AVWGCN Chebyshev order must be >= 2"

    f32, bf16 = jnp.float32, jnp.bfloat16
    E = node_embeddings.astype(f32)

    # ---- batch-invariant prologue (one shot; at an AGCRN call site this is
    # also timestep-invariant, so hoist this call out of any scan over time). --
    supports, bias = pl.pallas_call(
        functools.partial(_supports_bias_kernel, cheb_k=K, normalize=normalize),
        out_shape=(jax.ShapeDtypeStruct((K - 1, N, N), f32),
                   jax.ShapeDtypeStruct((N, Co), f32)),
    )(E, s_mask.astype(f32), bias_pool.astype(f32))

    # ---- pad the node axis to a sublane multiple so (Bt*Np, .) row blocks
    # satisfy the (8,128) rule for any N and B (padded rows/cols are zero). ----
    Np = -(-N // 8) * 8
    pn = Np - N
    x_p = jnp.pad(x.astype(f32), ((0, 0), (0, pn), (0, 0)))
    E_p = jnp.pad(E, ((0, pn), (0, 0)))
    bias_p = jnp.pad(bias, ((0, pn), (0, 0)))
    sup_p = jnp.pad(supports, ((0, 0), (0, pn), (0, pn)))

    Bt = _pick_batch_tile(B, Np, k=K, d=D, ci=Ci, co=Co)
    R = Bt * Np
    n_steps = B // Bt

    # Batch-varying stream (bf16 MXU operand, halves HBM bytes).
    x_rows = x_p.reshape(B * Np, Ci).astype(bf16)
    # Batch-invariant residents (constant index_maps, single-buffered).
    s_bf = sup_p.astype(bf16)                                        # (K-1, Np, Np)
    w_r = (jnp.transpose(weights_pool.astype(f32), (1, 0, 2, 3))     # (K, D, Ci, Co)
           .reshape(K * D * Ci, Co).astype(bf16))                    # rows = (k, d, i)
    e_rep = jnp.tile(jnp.repeat(E_p, Ci, axis=1), (Bt, 1))           # (R, D*Ci) f32
    bias_rep = jnp.tile(bias_p, (Bt, 1))                             # (R, Co)   f32

    # Honest cost estimate (no kron inflation).
    flops = n_steps * (2 * (K - 1) * Bt * Np * Np * D * Ci           # graph conv
                       + 2 * R * (K * D * Ci) * Co                   # fused contraction
                       + 2 * K * R * D * Ci + R * Co)                # E fold + bias
    bytes_accessed = (x_rows.size * 2 + B * Np * Co * 4
                      + s_bf.size * 2 + w_r.size * 2
                      + e_rep.size * 4 + bias_rep.size * 4)
    vmem_limit = int(min(max(2 * _step_vmem_bytes(Bt, Np, k=K, d=D, ci=Ci, co=Co),
                             16 * 2 ** 20), 64 * 2 ** 20))

    out_rows = pl.pallas_call(
        functools.partial(_avwgcn_kernel, cheb_k=K, embed_dim=D, bt=Bt, n_pad=Np),
        out_shape=jax.ShapeDtypeStruct((B * Np, Co), f32),
        grid=(n_steps,),
        in_specs=[
            pl.BlockSpec((R, Ci), lambda g: (g, 0)),                      # x rows
            pl.BlockSpec((K - 1, Np, Np), lambda g: (0, 0, 0),
                         pipeline_mode=pl.Buffered(1)),                   # supports
            pl.BlockSpec((K * D * Ci, Co), lambda g: (0, 0),
                         pipeline_mode=pl.Buffered(1)),                   # weight pool
            pl.BlockSpec((R, D * Ci), lambda g: (0, 0),
                         pipeline_mode=pl.Buffered(1)),                   # E replicated
            pl.BlockSpec((R, Co), lambda g: (0, 0),
                         pipeline_mode=pl.Buffered(1)),                   # bias
        ],
        out_specs=pl.BlockSpec((R, Co), lambda g: (g, 0)),
        compiler_params=pltpu.CompilerParams(
            dimension_semantics=("parallel",),
            vmem_limit_bytes=vmem_limit),
        cost_estimate=pl.CostEstimate(flops=int(flops), transcendentals=0,
                                      bytes_accessed=int(bytes_accessed)),
    )(x_rows, s_bf, w_r, e_rep, bias_rep)

    return out_rows.reshape(B, Np, Co)[:, :N, :]


# ---------------- pure-JAX reference (mirrors the PyTorch module) ----------------
def _avwgcn_ref(x, E, s_mask, w_pool, b_pool, cheb_k, normalize):
    N = E.shape[0]
    supports = jax.nn.softmax(jax.nn.relu(E @ E.T), axis=1)
    supports = supports * s_mask
    if normalize:
        supports = jax.nn.softmax(supports, axis=1)
    support_set = [jnp.eye(N, dtype=jnp.float32), supports]
    for _ in range(2, cheb_k):
        support_set.append(2.0 * supports @ support_set[-1] - support_set[-2])
    sup = jnp.stack(support_set, axis=0)
    weights = jnp.einsum('nd,dkio->nkio', E, w_pool)
    bias = E @ b_pool
    x_g = jnp.einsum('knm,bmc->bknc', sup, x)
    x_g = jnp.transpose(x_g, (0, 2, 1, 3))
    return jnp.einsum('bnki,nkio->bno', x_g, weights) + bias


if __name__ == "__main__":
    # Small, deterministic configuration consistent with the module.  B=4 so the
    # grid has 2 steps with Bt=2 (exercises the multi-batch-per-step path).
    B, N, dim_in, dim_out, cheb_k, D = 4, 16, 4, 32, 3, 8

    key = jax.random.PRNGKey(0)
    kx, ke, km, kw, kb = jax.random.split(key, 5)

    x = jax.random.normal(kx, (B, N, dim_in), dtype=jnp.float32)
    node_embeddings = jax.random.normal(ke, (N, D), dtype=jnp.float32)
    s_mask = (jax.random.uniform(km, (N, N)) > 0.3).astype(jnp.float32)
    # Deterministic parameter init (the nn.Parameters are uninitialized in the module).
    weights_pool = 0.1 * jax.random.normal(kw, (D, cheb_k, dim_in, dim_out),
                                           dtype=jnp.float32)
    bias_pool = 0.1 * jax.random.normal(kb, (D, dim_out), dtype=jnp.float32)

    for normalize in (False, True):
        out = avwgcn_pallas(x, node_embeddings, s_mask, weights_pool, bias_pool,
                            normalize=normalize)
        out = jax.block_until_ready(out)
        ref = _avwgcn_ref(x, node_embeddings, s_mask, weights_pool, bias_pool,
                          cheb_k, normalize)
        ref = jax.block_until_ready(ref)
        assert out.shape == (B, N, dim_out)
        # bf16 MXU operands with f32 accumulation => ~1e-2 scale deviation vs f32 ref.
        err = float(jnp.max(jnp.abs(out - ref)))
        assert bool(jnp.allclose(out, ref, rtol=2e-2, atol=2e-2)), (
            f"mismatch (normalize={normalize}): max abs diff = {err}")

    print("KERNEL_OK")
</pallas_src>

<mosaic_0001>
module attributes {stable_mosaic.version = 11 : i64} {
  func.func @_supports_bias_kernel(%arg0: memref<16x8xf32, #tpu.memory_space<vmem>>, %arg1: memref<16x16xf32, #tpu.memory_space<vmem>>, %arg2: memref<8x32xf32, #tpu.memory_space<vmem>>, %arg3: memref<2x16x16xf32, #tpu.memory_space<vmem>>, %arg4: memref<16x32xf32, #tpu.memory_space<vmem>>) attributes {dimension_semantics = [], scalar_prefetch = 0 : i64, scratch_operands = 0 : i64, tpu.core_type = #tpu.core_type<tc>} {
    %c0 = arith.constant 0 : index
    %c0_0 = arith.constant 0 : index
    %0 = vector.load %arg0[%c0, %c0_0] : memref<16x8xf32, #tpu.memory_space<vmem>>, vector<16x8xf32>
    %cst = arith.constant dense<0.000000e+00> : vector<16x16xf32>
    %1 = tpu.matmul %0, %0, %cst {dimension_numbers = #tpu.dot_dimension_numbers<[1], [1], [0], [0], [0, 0, 1, 0], [], []>} : vector<16x8xf32>, vector<16x8xf32>, vector<16x16xf32> -> vector<16x16xf32>
    %cst_1 = arith.constant 0.000000e+00 : f32
    %2 = vector.broadcast %cst_1 : f32 to vector<16x16xf32>
    %3 = arith.maximumf %1, %2 : vector<16x16xf32>
    %cst_2 = arith.constant dense<0xFF800000> : vector<16xf32>
    %4 = vector.multi_reduction <maximumf>, %3, %cst_2 [1] : vector<16x16xf32> to vector<16xf32>
    %5 = vector.shape_cast %4 : vector<16xf32> to vector<16x1xf32>
    %6 = vector.broadcast %5 : vector<16x1xf32> to vector<16x16xf32>
    %7 = arith.subf %3, %6 : vector<16x16xf32>
    %8 = math.exp %7 : vector<16x16xf32>
    %cst_3 = arith.constant dense<0.000000e+00> : vector<16xf32>
    %9 = vector.multi_reduction <add>, %8, %cst_3 [1] : vector<16x16xf32> to vector<16xf32>
    %10 = vector.shape_cast %9 : vector<16xf32> to vector<16x1xf32>
    %11 = vector.broadcast %10 : vector<16x1xf32> to vector<16x16xf32>
    %12 = arith.divf %8, %11 : vector<16x16xf32>
    %c0_4 = arith.constant 0 : index
    %c0_5 = arith.constant 0 : index
    %13 = vector.load %arg1[%c0_4, %c0_5] : memref<16x16xf32, #tpu.memory_space<vmem>>, vector<16x16xf32>
    %14 = arith.mulf %12, %13 : vector<16x16xf32>
    %c0_6 = arith.constant 0 : index
    %c0_7 = arith.constant 0 : index
    %c0_8 = arith.constant 0 : index
    %15 = vector.load %arg3[%c0_6, %c0_7, %c0_8] : memref<2x16x16xf32, #tpu.memory_space<vmem>>, vector<1x16x16xf32>
    %16 = vector.shape_cast %15 : vector<1x16x16xf32> to vector<16x16xf32>
    %17 = vector.shape_cast %14 : vector<16x16xf32> to vector<1x16x16xf32>
    tpu.vector_store %arg3[%c0_6, %c0_7, %c0_8], %17 {strides = array<i32>} : memref<2x16x16xf32, #tpu.memory_space<vmem>>, vector<1x16x16xf32>,
    %18 = tpu.iota {dimensions = array<i32: 0>} : vector<16x16xi32>
    %19 = tpu.iota {dimensions = array<i32: 1>} : vector<16x16xi32>
    %20 = arith.cmpi eq, %18, %19 : vector<16x16xi32>
    %21 = arith.extui %20 : vector<16x16xi1> to vector<16x16xi32>
    %22 = arith.sitofp %21 : vector<16x16xi32> to vector<16x16xf32>
    %cst_9 = arith.constant dense<0.000000e+00> : vector<16x16xf32>
    %23 = tpu.matmul %14, %14, %cst_9 {dimension_numbers = #tpu.dot_dimension_numbers<[1], [0], [0], [1], [0, 0, 1, 1], [], []>} : vector<16x16xf32>, vector<16x16xf32>, vector<16x16xf32> -> vector<16x16xf32>
    %cst_10 = arith.constant 2.000000e+00 : f32
    %24 = vector.broadcast %cst_10 : f32 to vector<16x16xf32>
    %25 = arith.mulf %24, %23 : vector<16x16xf32>
    %26 = arith.subf %25, %22 : vector<16x16xf32>
    %c1 = arith.constant 1 : index
    %c0_11 = arith.constant 0 : index
    %c0_12 = arith.constant 0 : index
    %27 = vector.load %arg3[%c1, %c0_11, %c0_12] : memref<2x16x16xf32, #tpu.memory_space<vmem>>, vector<1x16x16xf32>
    %28 = vector.shape_cast %27 : vector<1x16x16xf32> to vector<16x16xf32>
    %29 = vector.shape_cast %26 : vector<16x16xf32> to vector<1x16x16xf32>
    tpu.vector_store %arg3[%c1, %c0_11, %c0_12], %29 {strides = array<i32>} : memref<2x16x16xf32, #tpu.memory_space<vmem>>, vector<1x16x16xf32>,
    %c0_13 = arith.constant 0 : index
    %c0_14 = arith.constant 0 : index
    %30 = vector.load %arg2[%c0_13, %c0_14] : memref<8x32xf32, #tpu.memory_space<vmem>>, vector<8x32xf32>
    %cst_15 = arith.constant dense<0.000000e+00> : vector<16x32xf32>
    %31 = tpu.matmul %0, %30, %cst_15 {dimension_numbers = #tpu.dot_dimension_numbers<[1], [0], [0], [1], [0, 0, 1, 1], [], []>} : vector<16x8xf32>, vector<8x32xf32>, vector<16x32xf32> -> vector<16x32xf32>
    %c0_16 = arith.constant 0 : index
    %c0_17 = arith.constant 0 : index
    %32 = vector.load %arg4[%c0_16, %c0_17] : memref<16x32xf32, #tpu.memory_space<vmem>>, vector<16x32xf32>
    tpu.vector_store %arg4[%c0_16, %c0_17], %31 {strides = array<i32>} : memref<16x32xf32, #tpu.memory_space<vmem>>, vector<16x32xf32>,
    return
  }
}

</mosaic_0001>

<llo_original>
// kernel: tpu_custom_call.1
$region0: #{tpu_custom_call.1}
  #allocation0 [shape = 'u32[]', space=smem, size = 0x4, offset = 0x4, fixed_abs, tag = 'smem constant byte address 0x4 - core index']
  #allocation1 [shape = 'u32[144,128]{1,0:T(1,128)}', space=vmem, size = 0x12000, scoped, tag = 'internal scratch']
  %s0 = inlined_call_operand.vmem [shape: f32[16,8], index: 0, kind: input, shape index: {}]
  %s1 = inlined_call_operand.vmem [shape: f32[16,16], index: 1, kind: input, shape index: {}]
  %s2 = inlined_call_operand.vmem [shape: f32[8,32], index: 2, kind: input, shape index: {}]
  %s3 = inlined_call_operand.hbm [shape: f32[2,16,16], index: 3, kind: output, shape index: {0}]
  %s4 = inlined_call_operand.hbm [shape: f32[16,32], index: 4, kind: output, shape index: {1}]
  %5 = xla_tuple %s3, %s4
  %s6 = sld [smem:[#allocation0]]
  $region30: #{tpu_custom_call.1} parent=0
    _
  %s8 = ssub.s32 1, %s6
  %s9 = scalar_select 0, %s8, %s6
  $region1: #{tpu_custom_call.1} parent=0
    #allocation2 [shape = 'u8[16384]{0}', space=vmem, size = 0x4000, scoped, tag = 'output window, operand 0, single buffered']
    #allocation3 [shape = 's32[1]{0}', space=sflag, size = 0x4, scoped, tag = 'scoped memory for tpu_custom_call.1']
    #allocation4 [shape = 'u8[8192]{0}', space=vmem, size = 0x2000, scoped, tag = 'output window, operand 1, single buffered']
    #allocation5 [shape = 's32[1]{0}', space=sflag, size = 0x4, scoped, tag = 'scoped memory for tpu_custom_call.1']
    %10 = vsyncpa [#allocation3], 0
    %11 = vsyncpa [#allocation5], 0
    // Predicated region
    $region2: #{tpu_custom_call.1} parent=1 // pred_check
      _
    $region3: #{tpu_custom_call.1} parent=1 // pred_check_branch
      %13 = sbr.rel (0) target = $region5
    $region4: #{tpu_custom_call.1} parent=1 // pred_region
      _
    $region5: #{tpu_custom_call.1} parent=1 // pred_fallthru
      _
    // Predicated region
    $region6: #{tpu_custom_call.1} parent=1 // pred_check
      _
    $region7: #{tpu_custom_call.1} parent=1 // pred_check_branch
      %15 = sbr.rel (0) target = $region9
    $region8: #{tpu_custom_call.1} parent=1 // pred_region
      _
    $region9: #{tpu_custom_call.1} parent=1 // pred_fallthru
      _
    // Predicated region
    $region10: #{tpu_custom_call.1} parent=1 // pred_check
      _
    $region11: #{tpu_custom_call.1} parent=1 // pred_check_branch
      %17 = sbr.rel (0) target = $region13
    $region12: #{tpu_custom_call.1} parent=1 // pred_region
      _
    $region13: #{tpu_custom_call.1} parent=1 // pred_fallthru
      _
    %v18 = vld [vmem:[%s0] sm:$0xff]
    %v19 = vld [vmem:[%s0 + $0x8] sm:$0xff]
    %vm20 = vcmask 64512
    %v22 = vsel %vm20, %v18, 0
    %v25 = vsel %vm20, %v19, 0
    %27 = vmatprep.subr.mxu0 0.0
    %28 = vmatpush1.xpose.msra.mxu0 %v22
    %29 = vmatprep.subr.mxu0 0.0
    %30 = vmatpush1.xpose.msra.mxu0 %v25
    %31 = vmatprep.subr.mxu0 0.0
    %32 = vmatpush1.xpose.msra.mxu0 0.0
    %33 = vmatprep.subr.mxu0 0.0
    %34 = vmatpush1.xpose.msra.mxu0 0.0
    %35 = vmatprep.subr.mxu0 0.0
    %36 = vmatpush1.xpose.msra.mxu0 0.0
    %37 = vmatprep.subr.mxu0 0.0
    %38 = vmatpush1.xpose.msra.mxu0 0.0
    %39 = vmatprep.subr.mxu0 0.0
    %40 = vmatpush1.xpose.msra.mxu0 0.0
    %41 = vmatprep.subr.mxu0 0.0
    %42 = vmatpush1.xpose.msra.mxu0 0.0
    %43 = vmatprep.subr.mxu0 0.0
    %44 = vmatpush1.xpose.msra.mxu0 0.0
    %45 = vmatprep.subr.mxu0 0.0
    %46 = vmatpush1.xpose.msra.mxu0 0.0
    %47 = vmatprep.subr.mxu0 0.0
    %48 = vmatpush1.xpose.msra.mxu0 0.0
    %49 = vmatprep.subr.mxu0 0.0
    %50 = vmatpush1.xpose.msra.mxu0 0.0
    %51 = vmatprep.subr.mxu0 0.0
    %52 = vmatpush1.xpose.msra.mxu0 0.0
    %53 = vmatprep.subr.mxu0 0.0
    %54 = vmatpush1.xpose.msra.mxu0 0.0
    %55 = vmatprep.subr.mxu0 0.0
    %56 = vmatpush1.xpose.msra.mxu0 0.0
    %57 = vmatprep.subr.mxu0 0.0
    %58 = vmatpush1.xpose.msra.mxu0 0.0
    %59 = vmatprep.subr.mxu0 0.0
    %60 = vmatpush1.xpose.msra.mxu0 0.0
    %61 = vmatprep.subr.mxu0 0.0
    %62 = vmatpush1.xpose.msra.mxu0 0.0
    %63 = vmatprep.subr.mxu0 0.0
    %64 = vmatpush1.xpose.msra.mxu0 0.0
    %65 = vmatprep.subr.mxu0 0.0
    %66 = vmatpush1.xpose.msra.mxu0 0.0
    %67 = vmatprep.subr.mxu0 0.0
    %68 = vmatpush1.xpose.msra.mxu0 0.0
    %69 = vmatprep.subr.mxu0 0.0
    %70 = vmatpush1.xpose.msra.mxu0 0.0
    %71 = vmatprep.subr.mxu0 0.0
    %72 = vmatpush1.xpose.msra.mxu0 0.0
    %73 = vmatprep.subr.mxu0 0.0
    %74 = vmatpush1.xpose.msra.mxu0 0.0
    %75 = vmatprep.subr.mxu0 0.0
    %76 = vmatpush1.xpose.msra.mxu0 0.0
    %77 = vmatprep.subr.mxu0 0.0
    %78 = vmatpush1.xpose.msra.mxu0 0.0
    %79 = vmatprep.subr.mxu0 0.0
    %80 = vmatpush1.xpose.msra.mxu0 0.0
    %81 = vmatprep.subr.mxu0 0.0
    %82 = vmatpush1.xpose.msra.mxu0 0.0
    %83 = vmatprep.subr.mxu0 0.0
    %84 = vmatpush1.xpose.msra.mxu0 0.0
    %85 = vmatprep.subr.mxu0 0.0
    %86 = vmatpush1.xpose.msra.mxu0 0.0
    %87 = vmatprep.subr.mxu0 0.0
    %88 = vmatpush1.xpose.msra.mxu0 0.0
    %89 = vmatprep.subr.mxu0 0.0
    %90 = vmatpush1.xpose.msra.mxu0 0.0
    %91 = vmatprep.mubr.f32.mxu0 0.0
    %92 = vmatmul.mubr.f32.gmra.mrb[0].mxu0 %v22
    %v93 = vpop.f32.mrb[0].mxu0
    %v94 = vadd.f32 0.0, %v93
    %v95 = vpop.f32.mrb[0].mxu0
    %96 = vmatprep.mubr.f32.mxu0 0.0
    %97 = vmatmul.mubr.f32.gmra.mrb[0].mxu0 %v25
    %v98 = vpop.f32.mrb[0].mxu0
    %v99 = vadd.f32 0.0, %v98
    %v100 = vpop.f32.mrb[0].mxu0
    %101 = vdwg.mxu0
    %v102 = vmax.f32 %v94, 0.0
    %v103 = vmax.f32 %v99, 0.0
    %vm104 = vcmask 130048
    %v105 = vsel %vm104, %v102, -inf
    %106 = vmax.xlane.f32.xlu0 %v105
    %v107 = vpop.xlane.xlu0 %106
    %v108 = vsel %vm104, %v103, -inf
    %109 = vmax.xlane.f32.xlu0 %v108
    %v110 = vpop.xlane.xlu0 %109
    %v111 = vsub.f32 %v102, %v107
    %v112 = vsub.f32 %v103, %v110
    %v113 = vmul.f32 %v111, 1.442695
    %v114 = vpow.pop %v113
    %v115 = vmul.f32 %v112, 1.442695
    %v116 = vpow.pop %v115
    %v117 = vsel %vm104, %v114, 0.0
    %118 = vadd.xlane.f32.xlu0 %v117
    %v119 = vpop.xlane.xlu0 %118
    %v120 = vsel %vm104, %v116, 0.0
    %121 = vadd.xlane.f32.xlu0 %v120
    %v122 = vpop.xlane.xlu0 %121
    %v123 = vrcp.pop %v119
    %v124 = vmul.f32 %v114, %v123
    %v125 = vrcp.pop %v122
    %v126 = vmul.f32 %v116, %v125
    %v127 = vld [vmem:[%s1] sm:$0xff]
    %v128 = vld [vmem:[%s1 + $0x8] sm:$0xff]
    %v129 = vmul.f32 %v124, %v127
    %v130 = vmul.f32 %v126, %v128
    %131 = vst.msk [vmem:[#allocation2] sm:$0xff] %vm104, %v129
    %132 = vst.msk [vmem:[#allocation2 + $0x8] sm:$0xff] %vm104, %v130
    %v133 = vlaneseq
    %v134 = vshrl.u32 %v133, 7
    %v135 = vadd.s32 %v134, 8
    %v136 = vlaneseq
    %v137 = vand.u32 %v136, 127
    %vm138 = vcmp.eq.s32.totalorder %v134, %v137
    %vm139 = vcmp.eq.s32.totalorder %v135, %v137
    %v140 = vsel %vm138, 1, 0
    %v141 = vsel %vm139, 1, 0
    %v142 = vcvt.s32.f32 %v140
    %v143 = vcvt.s32.f32 %v141
    %v145 = vsel %vm104, %v129, 0
    %v148 = vsel %vm104, %v130, 0
    %150 = vmatprep.subr.mxu0 0.0
    %151 = vmatpush1.msra.mxu0 %v129
    %152 = vmatprep.subr.mxu0 0.0
    %153 = vmatpush1.msra.mxu0 %v130
    %154 = vmatprep.subr.mxu0 0.0
    %155 = vmatpush1.msra.mxu0 0.0
    %156 = vmatprep.subr.mxu0 0.0
    %157 = vmatpush1.msra.mxu0 0.0
    %158 = vmatprep.subr.mxu0 0.0
    %159 = vmatpush1.msra.mxu0 0.0
    %160 = vmatprep.subr.mxu0 0.0
    %161 = vmatpush1.msra.mxu0 0.0
    %162 = vmatprep.subr.mxu0 0.0
    %163 = vmatpush1.msra.mxu0 0.0
    %164 = vmatprep.subr.mxu0 0.0
    %165 = vmatpush1.msra.mxu0 0.0
    %166 = vmatprep.subr.mxu0 0.0
    %167 = vmatpush1.msra.mxu0 0.0
    %168 = vmatprep.subr.mxu0 0.0
    %169 = vmatpush1.msra.mxu0 0.0
    %170 = vmatprep.subr.mxu0 0.0
    %171 = vmatpush1.msra.mxu0 0.0
    %172 = vmatprep.subr.mxu0 0.0
    %173 = vmatpush1.msra.mxu0 0.0
    %174 = vmatprep.subr.mxu0 0.0
    %175 = vmatpush1.msra.mxu0 0.0
    %176 = vmatprep.subr.mxu0 0.0
    %177 = vmatpush1.msra.mxu0 0.0
    %178 = vmatprep.subr.mxu0 0.0
    %179 = vmatpush1.msra.mxu0 0.0
    %180 = vmatprep.subr.mxu0 0.0
    %181 = vmatpush1.msra.mxu0 0.0
    %182 = vmatprep.subr.mxu0 0.0
    %183 = vmatpush1.msra.mxu0 0.0
    %184 = vmatprep.subr.mxu0 0.0
    %185 = vmatpush1.msra.mxu0 0.0
    %186 = vmatprep.subr.mxu0 0.0
    %187 = vmatpush1.msra.mxu0 0.0
    %188 = vmatprep.subr.mxu0 0.0
    %189 = vmatpush1.msra.mxu0 0.0
    %190 = vmatprep.subr.mxu0 0.0
    %191 = vmatpush1.msra.mxu0 0.0
    %192 = vmatprep.subr.mxu0 0.0
    %193 = vmatpush1.msra.mxu0 0.0
    %194 = vmatprep.subr.mxu0 0.0
    %195 = vmatpush1.msra.mxu0 0.0
    %196 = vmatprep.subr.mxu0 0.0
    %197 = vmatpush1.msra.mxu0 0.0
    %198 = vmatprep.subr.mxu0 0.0
    %199 = vmatpush1.msra.mxu0 0.0
    %200 = vmatprep.subr.mxu0 0.0
    %201 = vmatpush1.msra.mxu0 0.0
    %202 = vmatprep.subr.mxu0 0.0
    %203 = vmatpush1.msra.mxu0 0.0
    %204 = vmatprep.subr.mxu0 0.0
    %205 = vmatpush1.msra.mxu0 0.0
    %206 = vmatprep.subr.mxu0 0.0
    %207 = vmatpush1.msra.mxu0 0.0
    %208 = vmatprep.subr.mxu0 0.0
    %209 = vmatpush1.msra.mxu0 0.0
    %210 = vmatprep.subr.mxu0 0.0
    %211 = vmatpush1.msra.mxu0 0.0
    %212 = vmatprep.subr.mxu0 0.0
    %213 = vmatpush1.msra.mxu0 0.0
    %214 = vmatprep.mubr.f32.mxu0 0.0
    %215 = vmatmul.mubr.f32.gmra.mrb[0].mxu0 %v145
    %v216 = vpop.f32.mrb[0].mxu0
    %v217 = vadd.f32 0.0, %v216
    %v218 = vpop.f32.mrb[0].mxu0
    %219 = vmatprep.mubr.f32.mxu0 0.0
    %220 = vmatmul.mubr.f32.gmra.mrb[0].mxu0 %v148
    %v221 = vpop.f32.mrb[0].mxu0
    %v222 = vadd.f32 0.0, %v221
    %v223 = vpop.f32.mrb[0].mxu0
    %224 = vdwg.mxu0
    %v225 = vmul.f32 %v217, 2.0
    %v226 = vmul.f32 %v222, 2.0
    %v227 = vsub.f32 %v225, %v142
    %v228 = vsub.f32 %v226, %v143
    %s229 = scalar_lea.vmem [#allocation2], 16
    %230 = vst.msk [vmem:[%s229] sm:$0xff] %vm104, %v227
    %231 = vst.msk [vmem:[%s229 + $0x8] sm:$0xff] %vm104, %v228
    %v232 = vld [vmem:[%s2] sm:$0xff]
    %233 = vmatprep.subr.mxu0 0.0
    %234 = vmatpush1.msra.mxu0 %v232
    %235 = vmatprep.subr.mxu0 0.0
    %236 = vmatpush1.msra.mxu0 0.0
    %237 = vmatprep.subr.mxu0 0.0
    %238 = vmatpush1.msra.mxu0 0.0
    %239 = vmatprep.subr.mxu0 0.0
    %240 = vmatpush1.msra.mxu0 0.0
    %241 = vmatprep.subr.mxu0 0.0
    %242 = vmatpush1.msra.mxu0 0.0
    %243 = vmatprep.subr.mxu0 0.0
    %244 = vmatpush1.msra.mxu0 0.0
    %245 = vmatprep.subr.mxu0 0.0
    %246 = vmatpush1.msra.mxu0 0.0
    %247 = vmatprep.subr.mxu0 0.0
    %248 = vmatpush1.msra.mxu0 0.0
    %249 = vmatprep.subr.mxu0 0.0
    %250 = vmatpush1.msra.mxu0 0.0
    %251 = vmatprep.subr.mxu0 0.0
    %252 = vmatpush1.msra.mxu0 0.0
    %253 = vmatprep.subr.mxu0 0.0
    %254 = vmatpush1.msra.mxu0 0.0
    %255 = vmatprep.subr.mxu0 0.0
    %256 = vmatpush1.msra.mxu0 0.0
    %257 = vmatprep.subr.mxu0 0.0
    %258 = vmatpush1.msra.mxu0 0.0
    %259 = vmatprep.subr.mxu0 0.0
    %260 = vmatpush1.msra.mxu0 0.0
    %261 = vmatprep.subr.mxu0 0.0
    %262 = vmatpush1.msra.mxu0 0.0
    %263 = vmatprep.subr.mxu0 0.0
    %264 = vmatpush1.msra.mxu0 0.0
    %265 = vmatprep.subr.mxu0 0.0
    %266 = vmatpush1.msra.mxu0 0.0
    %267 = vmatprep.subr.mxu0 0.0
    %268 = vmatpush1.msra.mxu0 0.0
    %269 = vmatprep.subr.mxu0 0.0
    %270 = vmatpush1.msra.mxu0 0.0
    %271 = vmatprep.subr.mxu0 0.0
    %272 = vmatpush1.msra.mxu0 0.0
    %273 = vmatprep.subr.mxu0 0.0
    %274 = vmatpush1.msra.mxu0 0.0
    %275 = vmatprep.subr.mxu0 0.0
    %276 = vmatpush1.msra.mxu0 0.0
    %277 = vmatprep.subr.mxu0 0.0
    %278 = vmatpush1.msra.mxu0 0.0
    %279 = vmatprep.subr.mxu0 0.0
    %280 = vmatpush1.msra.mxu0 0.0
    %281 = vmatprep.subr.mxu0 0.0
    %282 = vmatpush1.msra.mxu0 0.0
    %283 = vmatprep.subr.mxu0 0.0
    %284 = vmatpush1.msra.mxu0 0.0
    %285 = vmatprep.subr.mxu0 0.0
    %286 = vmatpush1.msra.mxu0 0.0
    %287 = vmatprep.subr.mxu0 0.0
    %288 = vmatpush1.msra.mxu0 0.0
    %289 = vmatprep.subr.mxu0 0.0
    %290 = vmatpush1.msra.mxu0 0.0
    %291 = vmatprep.subr.mxu0 0.0
    %292 = vmatpush1.msra.mxu0 0.0
    %293 = vmatprep.subr.mxu0 0.0
    %294 = vmatpush1.msra.mxu0 0.0
    %295 = vmatprep.subr.mxu0 0.0
    %296 = vmatpush1.msra.mxu0 0.0
    %297 = vmatprep.mubr.f32.mxu0 0.0
    %298 = vmatmul.mubr.f32.gmra.mrb[0].mxu0 %v22
    %v299 = vpop.f32.mrb[0].mxu0
    %v300 = vadd.f32 0.0, %v299
    %v301 = vpop.f32.mrb[0].mxu0
    %302 = vmatprep.mubr.f32.mxu0 0.0
    %303 = vmatmul.mubr.f32.gmra.mrb[0].mxu0 %v25
    %v304 = vpop.f32.mrb[0].mxu0
    %v305 = vadd.f32 0.0, %v304
    %v306 = vpop.f32.mrb[0].mxu0
    %307 = vdwg.mxu0
    %vm308 = vcmask 261120
    %309 = vst.msk [vmem:[#allocation4] sm:$0xff] %vm308, %v300
    %310 = vst.msk [vmem:[#allocation4 + $0x8] sm:$0xff] %vm308, %v305
    // Predicated region
    $region14: #{tpu_custom_call.1} parent=1 // pred_check
      _
    $region15: #{tpu_custom_call.1} parent=1 // pred_check_branch
      %312 = sbr.rel (0) target = $region17
    $region16: #{tpu_custom_call.1} parent=1 // pred_region
      %s314 = ssub.s32 512, 512
      %315 = vsyncadd [#allocation3], %s314
      %s316 = sshll.u32 [#allocation2], 4
      %s317 = int_to_ptr.vmem [resolvable:$true] %s316
      %322 = dma.vmem_to_hbm [thread:$0]  %s317, 512, %s3, [#allocation3], 128, 128, 8
    $region17: #{tpu_custom_call.1} parent=1 // pred_fallthru
      _
    // Predicated region
    $region18: #{tpu_custom_call.1} parent=1 // pred_check
      _
    $region19: #{tpu_custom_call.1} parent=1 // pred_check_branch
      %324 = sbr.rel (0) target = $region21
    $region20: #{tpu_custom_call.1} parent=1 // pred_region
      %s326 = ssub.s32 256, 256
      %327 = vsyncadd [#allocation5], %s326
      %s328 = sshll.u32 [#allocation4], 4
      %s329 = int_to_ptr.vmem [resolvable:$true] %s328
      %334 = dma.vmem_to_hbm [thread:$0]  %s329, 256, %s4, [#allocation5], 128, 128, 8
    $region21: #{tpu_custom_call.1} parent=1 // pred_fallthru
      _
    // Predicated region
    $region22: #{tpu_custom_call.1} parent=1 // pred_check
      _
    $region23: #{tpu_custom_call.1} parent=1 // pred_check_branch
      %336 = sbr.rel (0) target = $region25
    $region24: #{tpu_custom_call.1} parent=1 // pred_region
      %337 = dma.done [#allocation3], 512
    $region25: #{tpu_custom_call.1} parent=1 // pred_fallthru
      _
    // Predicated region
    $region26: #{tpu_custom_call.1} parent=1 // pred_check
      _
    $region27: #{tpu_custom_call.1} parent=1 // pred_check_branch
      %339 = sbr.rel (0) target = $region29
    $region28: #{tpu_custom_call.1} parent=1 // pred_region
      %340 = dma.done [#allocation5], 256
    $region29: #{tpu_custom_call.1} parent=1 // pred_fallthru
      _
    %341 = vsyncpa [#allocation3], 1
    %342 = vsyncpa [#allocation5], 1

</llo_original>
